<compile_context>
chip_gen: v5e
topology: v5e:2x2
jax: 0.10.0
libtpu: 0.0.40
codegen_flags: <defaults>
</compile_context>

<pallas_src>
import jax
import jax.numpy as jnp
from jax.experimental import pallas as pl
from jax.experimental.pallas import tpu as pltpu

_LANE = 128

# Flipped to False at runtime if this Pallas build rejects pl.Buffered(1)
# (single-buffered resident operands); everything still runs, just with the
# default double buffering for those operands.
_SINGLE_BUFFER_OK = True


def _round_up(n: int, m: int) -> int:
    return ((n + m - 1) // m) * m


def _vmem_usable_bytes() -> int:
    """Per-generation usable VMEM (capacity minus headroom for Mosaic)."""
    try:
        cap = int(pltpu.get_tpu_info().vmem_capacity_bytes)
    except Exception:
        cap = 64 * 1024 * 1024  # conservative fallback (v7x per-core size)
    return max(cap - (24 << 20), cap // 2)


def prepare_params(w1, b1, w2, b2, *, compute_dtype=jnp.bfloat16):
    """Pad weights/biases to 128-lane multiples and cast matmul operands.

    Call ONCE and cache the result; doing this per forward call costs more
    HBM traffic than the kernel itself for small RL heads.
    Zero padding is semantically inert: padded x columns multiply zero W1
    rows; padded H lanes see zero bias -> relu(0)=0 -> multiply zero W2 rows;
    padded D_out lanes are sliced away by the wrapper.
    """
    D_in, H = w1.shape
    D_out = w2.shape[-1]
    D_in_p = _round_up(D_in, _LANE)
    H_p = _round_up(H, _LANE)
    D_out_p = _round_up(D_out, _LANE)

    b1 = jnp.reshape(b1, (1, H))
    b2 = jnp.reshape(b2, (1, D_out))

    return dict(
        w1=jnp.pad(w1, ((0, D_in_p - D_in), (0, H_p - H))).astype(compute_dtype),
        b1=jnp.pad(b1, ((0, 0), (0, H_p - H))).astype(jnp.float32),
        w2=jnp.pad(w2, ((0, H_p - H), (0, D_out_p - D_out))).astype(compute_dtype),
        b2=jnp.pad(b2, ((0, 0), (0, D_out_p - D_out))).astype(jnp.float32),
        d_in=D_in, hidden=H, d_out=D_out,
        d_in_p=D_in_p, h_p=H_p, d_out_p=D_out_p,
        compute_dtype=jnp.dtype(compute_dtype),
    )


def mlp_forward_kernel(x_ref, w1_ref, b1_ref, w2_ref, b2_ref, o_ref, h_acc):
    """grid = (batch_tiles, k_tiles); k (reduction over D_in) is innermost."""
    k = pl.program_id(1)

    @pl.when(k == 0)
    def _():
        h_acc[...] = jnp.zeros_like(h_acc)

    # Hidden-layer partial product on the MXU, f32 accumulation in VMEM.
    h_acc[...] += jnp.dot(x_ref[...], w1_ref[...],
                          preferred_element_type=jnp.float32)

    @pl.when(k == pl.num_programs(1) - 1)
    def _():
        # Epilogue: bias + ReLU in f32 on the VPU, second MXU pass, bias, store.
        h = jnp.maximum(h_acc[...] + b1_ref[...], 0.0)
        out = jnp.dot(h.astype(w2_ref.dtype), w2_ref[...],
                      preferred_element_type=jnp.float32)
        o_ref[...] = (out + b2_ref[...]).astype(o_ref.dtype)


def base_network_forward(x, params, *, batch_tile: int = 512, k_tile=None,
                         out_dtype=jnp.bfloat16):
    """Pallas forward pass: (B, D_in) -> (B, D_out) using prepared `params`.

    Precision contract: matmuls run in params['compute_dtype'] (default bf16)
    with f32 MXU accumulation and a f32 bias/ReLU epilogue; the output is cast
    to `out_dtype` (default bf16) before the HBM writeback.
    """
    if x.ndim > 2:                      # flatten image-style observations
        x = x.reshape(x.shape[0], -1)
    B, D_in = x.shape
    assert D_in == params["d_in"], "input feature dim mismatch"

    cdt = params["compute_dtype"]
    cbytes = cdt.itemsize
    obytes = jnp.dtype(out_dtype).itemsize
    D_out = params["d_out"]
    D_in_p, H_p, D_out_p = params["d_in_p"], params["h_p"], params["d_out_p"]

    # ---- batch tiling -------------------------------------------------------
    # bf16 min tile is (16, 128); f32 is (8, 128).
    row_align = 16 if cbytes == 2 else 8
    num_b = pl.cdiv(B, batch_tile)
    if B >= 4 * row_align:
        num_b = max(num_b, 2)           # >=2 grid steps: keep both v7x TCs busy
    TB = _round_up(pl.cdiv(B, num_b), row_align)
    num_b = pl.cdiv(B, TB)              # balanced tiles -> minimal dead rows
    Bp = TB * num_b

    # ---- K (D_in) tiling ----------------------------------------------------
    vmem_usable = _vmem_usable_bytes()
    resident = H_p * D_out_p * cbytes + (H_p + D_out_p) * 4     # W2, b1, b2
    scratch = TB * H_p * 4                                      # f32 h accumulator
    out_stream = 2 * TB * D_out_p * obytes                      # double-buffered out
    w1_bytes = D_in_p * H_p * cbytes

    if k_tile is not None:
        tk_cap = max(int(k_tile) // _LANE, 1)
    elif w1_bytes + 2 * TB * D_in_p * cbytes <= vmem_usable - (resident + scratch + out_stream):
        tk_cap = D_in_p // _LANE        # whole W1 stays VMEM-resident
    else:
        # Stream double-buffered (TK, H_p) W1 tiles + matching (TB, TK) x tiles.
        per_k = 2 * (H_p + TB) * cbytes * _LANE
        avail = max(vmem_usable - (resident + scratch + out_stream), per_k)
        tk_cap = max(avail // per_k, 1)
    # TK must evenly divide the 128-aligned D_in so the K grid is exact.
    m = D_in_p // _LANE
    d = min(max(tk_cap, 1), m)
    while m % d:
        d -= 1
    TK = d * _LANE
    num_k = D_in_p // TK
    w1_resident = num_k == 1

    # ---- per-call input prep (only x; weights were prepared once) ----------
    x_p = jnp.pad(x, ((0, Bp - B), (0, D_in_p - D_in))).astype(cdt)

    cost = pl.CostEstimate(
        flops=2 * Bp * (D_in_p * H_p + H_p * D_out_p),
        transcendentals=0,
        bytes_accessed=(x_p.size * cbytes
                        + params["w1"].size * cbytes * (1 if w1_resident else num_b)
                        + params["w2"].size * cbytes
                        + (params["b1"].size + params["b2"].size) * 4
                        + Bp * D_out_p * obytes),
    )

    def run(single_buffer):
        def spec(shape, index_map, resident_op):
            if resident_op and single_buffer:
                # Constant index_map -> no benefit from double buffering.
                return pl.BlockSpec(shape, index_map, pipeline_mode=pl.Buffered(1))
            return pl.BlockSpec(shape, index_map)

        w1_vmem = (w1_bytes * (1 if single_buffer else 2) if w1_resident
                   else 2 * TK * H_p * cbytes)
        res_mult = 1 if single_buffer else 2
        vmem_needed = (res_mult * resident + scratch + out_stream
                       + 2 * TB * TK * cbytes + w1_vmem)
        vmem_limit = int(min(max(vmem_needed + (8 << 20), 16 << 20), vmem_usable))

        return pl.pallas_call(
            mlp_forward_kernel,
            out_shape=jax.ShapeDtypeStruct((Bp, D_out_p), out_dtype),
            grid=(num_b, num_k),
            in_specs=[
                # x streams over (batch, K).  If its DMA is exposed at very
                # large D_in, sweep pipeline_mode=pl.Buffered(3) here.
                pl.BlockSpec((TB, TK), lambda i, k: (i, k)),
                spec((TK, H_p), lambda i, k: (k, 0), w1_resident),   # W1
                spec((1, H_p), lambda i, k: (0, 0), True),           # b1
                spec((H_p, D_out_p), lambda i, k: (0, 0), True),     # W2
                spec((1, D_out_p), lambda i, k: (0, 0), True),       # b2
            ],
            out_specs=pl.BlockSpec((TB, D_out_p), lambda i, k: (i, 0)),
            scratch_shapes=[pltpu.VMEM((TB, H_p), jnp.float32)],
            compiler_params=pltpu.CompilerParams(
                dimension_semantics=("parallel", "arbitrary"),
                vmem_limit_bytes=vmem_limit,
            ),
            cost_estimate=cost,
        )(x_p, params["w1"], params["b1"], params["w2"], params["b2"])

    global _SINGLE_BUFFER_OK
    if _SINGLE_BUFFER_OK:
        try:
            out_padded = run(True)
        except Exception:
            _SINGLE_BUFFER_OK = False   # this build rejects Buffered(1); retry
            out_padded = run(False)
    else:
        out_padded = run(False)

    return out_padded[:B, :D_out]


def init_params(key, d_in, hidden, d_out):
    """Deterministic synthetic parameter init (matches nn.Linear shapes)."""
    k1, k2, k3, k4 = jax.random.split(key, 4)
    scale1 = 1.0 / jnp.sqrt(d_in)
    scale2 = 1.0 / jnp.sqrt(hidden)
    w1 = jax.random.uniform(k1, (d_in, hidden), jnp.float32, -scale1, scale1)
    b1 = jax.random.uniform(k2, (1, hidden), jnp.float32, -scale1, scale1)
    w2 = jax.random.uniform(k3, (hidden, d_out), jnp.float32, -scale2, scale2)
    b2 = jax.random.uniform(k4, (1, d_out), jnp.float32, -scale2, scale2)
    return w1, b1, w2, b2


def _reference(x, w1, b1, w2, b2, compute_dtype):
    """Reference matching the kernel's compute-dtype matmul / f32-acc pipeline."""
    h = jnp.dot(x.astype(compute_dtype), w1.astype(compute_dtype),
                preferred_element_type=jnp.float32)
    h = jnp.maximum(h + b1, 0.0)
    return jnp.dot(h.astype(compute_dtype), w2.astype(compute_dtype),
                   preferred_element_type=jnp.float32) + b2


if __name__ == "__main__":
    key = jax.random.PRNGKey(0)

    # ---- case 1: tiny head — single batch tile, single K tile --------------
    B, D_in, H, D_out = 8, 32, 64, 8
    kx, kp, key = jax.random.split(key, 3)
    x = jax.random.normal(kx, (B, D_in), jnp.float32)
    w1, b1, w2, b2 = init_params(kp, D_in, H, D_out)
    params = prepare_params(w1, b1, w2, b2)          # pad/cast ONCE, then reuse
    out = jax.block_until_ready(base_network_forward(x, params))

    ref = _reference(x, w1, b1, w2, b2, jnp.bfloat16)
    ref_f32 = jnp.maximum(x @ w1 + b1, 0.0) @ w2 + b2
    assert out.shape == (B, D_out) and out.dtype == jnp.bfloat16
    assert jnp.allclose(out.astype(jnp.float32),
                        ref.astype(jnp.bfloat16).astype(jnp.float32),
                        atol=1e-2, rtol=1e-2)
    assert jnp.allclose(out.astype(jnp.float32), ref_f32, atol=5e-2, rtol=5e-2)

    # ---- case 2: exercises the batch grid (2 tiles) + K-axis accumulation --
    B2, D_in2, H2, D_out2 = 100, 256, 128, 10
    kx2, kp2, key = jax.random.split(key, 3)
    x2 = jax.random.normal(kx2, (B2, D_in2), jnp.float32)
    w1b, b1b, w2b, b2b = init_params(kp2, D_in2, H2, D_out2)
    params2 = prepare_params(w1b, b1b, w2b, b2b)
    out2 = jax.block_until_ready(
        base_network_forward(x2, params2, k_tile=128))   # forces num_k == 2

    ref2 = _reference(x2, w1b, b1b, w2b, b2b, jnp.bfloat16)
    ref2_f32 = jnp.maximum(x2 @ w1b + b1b, 0.0) @ w2b + b2b
    assert out2.shape == (B2, D_out2)
    assert jnp.allclose(out2.astype(jnp.float32),
                        ref2.astype(jnp.bfloat16).astype(jnp.float32),
                        atol=1e-2, rtol=1e-2)
    assert jnp.allclose(out2.astype(jnp.float32), ref2_f32, atol=5e-2, rtol=5e-2)

    print("KERNEL_OK")
</pallas_src>

<mosaic_0001>
module attributes {stable_mosaic.version = 11 : i64} {
  func.func @mlp_forward_kernel(%arg0: i32, %arg1: i32, %arg2: memref<16x128xbf16, #tpu.memory_space<vmem>>, %arg3: memref<128x128xbf16, #tpu.memory_space<vmem>>, %arg4: memref<1x128xf32, #tpu.memory_space<vmem>>, %arg5: memref<128x128xbf16, #tpu.memory_space<vmem>>, %arg6: memref<1x128xf32, #tpu.memory_space<vmem>>, %arg7: memref<16x128xbf16, #tpu.memory_space<vmem>>, %arg8: memref<16x128xf32, #tpu.memory_space<vmem>>) attributes {dimension_semantics = [#tpu.dimension_semantics<parallel>, #tpu.dimension_semantics<arbitrary>], iteration_bounds = array<i64: 1, 1>, scalar_prefetch = 0 : i64, scratch_operands = 1 : i64, tpu.core_type = #tpu.core_type<tc>, window_params = [{transform_indices = @transform_0, window_bounds = array<i64: 16, 128>}, {pipeline_mode = #tpu.pipeline_mode<synchronous>, transform_indices = @transform_1, window_bounds = array<i64: 128, 128>}, {pipeline_mode = #tpu.pipeline_mode<synchronous>, transform_indices = @transform_2, window_bounds = array<i64: 1, 128>}, {pipeline_mode = #tpu.pipeline_mode<synchronous>, transform_indices = @transform_3, window_bounds = array<i64: 128, 128>}, {pipeline_mode = #tpu.pipeline_mode<synchronous>, transform_indices = @transform_4, window_bounds = array<i64: 1, 128>}, {transform_indices = @transform_5, window_bounds = array<i64: 16, 128>}]} {
    %c0_i32 = arith.constant 0 : i32
    %0 = arith.cmpi eq, %arg1, %c0_i32 : i32
    %1 = arith.extui %0 : i1 to i32
    %c0_i32_0 = arith.constant 0 : i32
    %2 = arith.cmpi ne, %1, %c0_i32_0 : i32
    scf.if %2 {
      %cst_10 = arith.constant 0.000000e+00 : f32
      %12 = vector.broadcast %cst_10 : f32 to vector<16x128xf32>
      %c0_11 = arith.constant 0 : index
      %c0_12 = arith.constant 0 : index
      %13 = vector.load %arg8[%c0_11, %c0_12] : memref<16x128xf32, #tpu.memory_space<vmem>>, vector<16x128xf32>
      tpu.vector_store %arg8[%c0_11, %c0_12], %12 {strides = array<i32>} : memref<16x128xf32, #tpu.memory_space<vmem>>, vector<16x128xf32>,
    } else {
    }
    %c0 = arith.constant 0 : index
    %c0_1 = arith.constant 0 : index
    %3 = vector.load %arg8[%c0, %c0_1] : memref<16x128xf32, #tpu.memory_space<vmem>>, vector<16x128xf32>
    %c0_2 = arith.constant 0 : index
    %c0_3 = arith.constant 0 : index
    %4 = vector.load %arg2[%c0_2, %c0_3] : memref<16x128xbf16, #tpu.memory_space<vmem>>, vector<16x128xbf16>
    %c0_4 = arith.constant 0 : index
    %c0_5 = arith.constant 0 : index
    %5 = vector.load %arg3[%c0_4, %c0_5] : memref<128x128xbf16, #tpu.memory_space<vmem>>, vector<128x128xbf16>
    %cst = arith.constant dense<0.000000e+00> : vector<16x128xf32>
    %6 = tpu.matmul %4, %5, %cst {dimension_numbers = #tpu.dot_dimension_numbers<[1], [0], [0], [1], [0, 0, 1, 1], [], []>} : vector<16x128xbf16>, vector<128x128xbf16>, vector<16x128xf32> -> vector<16x128xf32>
    %7 = arith.addf %3, %6 : vector<16x128xf32>
    %c0_6 = arith.constant 0 : index
    %c0_7 = arith.constant 0 : index
    %8 = vector.load %arg8[%c0_6, %c0_7] : memref<16x128xf32, #tpu.memory_space<vmem>>, vector<16x128xf32>
    tpu.vector_store %arg8[%c0_6, %c0_7], %7 {strides = array<i32>} : memref<16x128xf32, #tpu.memory_space<vmem>>, vector<16x128xf32>,
    %c0_i32_8 = arith.constant 0 : i32
    %9 = arith.cmpi eq, %arg1, %c0_i32_8 : i32
    %10 = arith.extui %9 : i1 to i32
    %c0_i32_9 = arith.constant 0 : i32
    %11 = arith.cmpi ne, %10, %c0_i32_9 : i32
    scf.if %11 {
      %c0_10 = arith.constant 0 : index
      %c0_11 = arith.constant 0 : index
      %12 = vector.load %arg8[%c0_10, %c0_11] : memref<16x128xf32, #tpu.memory_space<vmem>>, vector<16x128xf32>
      %c0_12 = arith.constant 0 : index
      %c0_13 = arith.constant 0 : index
      %13 = vector.load %arg4[%c0_12, %c0_13] : memref<1x128xf32, #tpu.memory_space<vmem>>, vector<1x128xf32>
      %14 = vector.broadcast %13 : vector<1x128xf32> to vector<16x128xf32>
      %15 = arith.addf %12, %14 : vector<16x128xf32>
      %cst_14 = arith.constant 0.000000e+00 : f32
      %16 = vector.broadcast %cst_14 : f32 to vector<16x128xf32>
      %17 = arith.maximumf %15, %16 : vector<16x128xf32>
      %18 = arith.truncf %17 : vector<16x128xf32> to vector<16x128xbf16>
      %c0_15 = arith.constant 0 : index
      %c0_16 = arith.constant 0 : index
      %19 = vector.load %arg5[%c0_15, %c0_16] : memref<128x128xbf16, #tpu.memory_space<vmem>>, vector<128x128xbf16>
      %cst_17 = arith.constant dense<0.000000e+00> : vector<16x128xf32>
      %20 = tpu.matmul %18, %19, %cst_17 {dimension_numbers = #tpu.dot_dimension_numbers<[1], [0], [0], [1], [0, 0, 1, 1], [], []>} : vector<16x128xbf16>, vector<128x128xbf16>, vector<16x128xf32> -> vector<16x128xf32>
      %c0_18 = arith.constant 0 : index
      %c0_19 = arith.constant 0 : index
      %21 = vector.load %arg6[%c0_18, %c0_19] : memref<1x128xf32, #tpu.memory_space<vmem>>, vector<1x128xf32>
      %22 = vector.broadcast %21 : vector<1x128xf32> to vector<16x128xf32>
      %23 = arith.addf %20, %22 : vector<16x128xf32>
      %24 = arith.truncf %23 : vector<16x128xf32> to vector<16x128xbf16>
      %c0_20 = arith.constant 0 : index
      %c0_21 = arith.constant 0 : index
      %25 = vector.load %arg7[%c0_20, %c0_21] : memref<16x128xbf16, #tpu.memory_space<vmem>>, vector<16x128xbf16>
      tpu.vector_store %arg7[%c0_20, %c0_21], %24 {strides = array<i32>} : memref<16x128xbf16, #tpu.memory_space<vmem>>, vector<16x128xbf16>,
    } else {
    }
    return
  }
  func.func @transform_0(%arg0: i32, %arg1: i32) -> (i32, i32) {
    %c0_i32 = arith.constant 0 : i32
    return %arg0, %arg1 : i32, i32
  }
  func.func @transform_1(%arg0: i32, %arg1: i32) -> (i32, i32) {
    %c0_i32 = arith.constant 0 : i32
    %c0_i32_0 = arith.constant 0 : i32
    return %arg1, %c0_i32 : i32, i32
  }
  func.func @transform_2(%arg0: i32, %arg1: i32) -> (i32, i32) {
    %c0_i32 = arith.constant 0 : i32
    %c0_i32_0 = arith.constant 0 : i32
    %c0_i32_1 = arith.constant 0 : i32
    return %c0_i32, %c0_i32_0 : i32, i32
  }
  func.func @transform_3(%arg0: i32, %arg1: i32) -> (i32, i32) {
    %c0_i32 = arith.constant 0 : i32
    %c0_i32_0 = arith.constant 0 : i32
    %c0_i32_1 = arith.constant 0 : i32
    return %c0_i32, %c0_i32_0 : i32, i32
  }
  func.func @transform_4(%arg0: i32, %arg1: i32) -> (i32, i32) {
    %c0_i32 = arith.constant 0 : i32
    %c0_i32_0 = arith.constant 0 : i32
    %c0_i32_1 = arith.constant 0 : i32
    return %c0_i32, %c0_i32_0 : i32, i32
  }
  func.func @transform_5(%arg0: i32, %arg1: i32) -> (i32, i32) {
    %c0_i32 = arith.constant 0 : i32
    %c0_i32_0 = arith.constant 0 : i32
    return %arg0, %c0_i32 : i32, i32
  }
}

module attributes {stable_mosaic.version = 11 : i64} {
  func.func @mlp_forward_kernel(%arg0: i32, %arg1: i32, %arg2: memref<16x128xbf16, #tpu.memory_space<vmem>>, %arg3: memref<128x128xbf16, #tpu.memory_space<vmem>>, %arg4: memref<1x128xf32, #tpu.memory_space<vmem>>, %arg5: memref<128x128xbf16, #tpu.memory_space<vmem>>, %arg6: memref<1x128xf32, #tpu.memory_space<vmem>>, %arg7: memref<16x128xbf16, #tpu.memory_space<vmem>>, %arg8: memref<16x128xf32, #tpu.memory_space<vmem>>) attributes {dimension_semantics = [#tpu.dimension_semantics<parallel>, #tpu.dimension_semantics<arbitrary>], iteration_bounds = array<i64: 1, 1>, scalar_prefetch = 0 : i64, scratch_operands = 1 : i64, tpu.core_type = #tpu.core_type<tc>, window_params = [{transform_indices = @transform_0, window_bounds = array<i64: 16, 128>}, {transform_indices = @transform_1, window_bounds = array<i64: 128, 128>}, {pipeline_mode = #tpu.pipeline_mode<synchronous>, transform_indices = @transform_2, window_bounds = array<i64: 1, 128>}, {pipeline_mode = #tpu.pipeline_mode<synchronous>, transform_indices = @transform_3, window_bounds = array<i64: 128, 128>}, {pipeline_mode = #tpu.pipeline_mode<synchronous>, transform_indices = @transform_4, window_bounds = array<i64: 1, 128>}, {transform_indices = @transform_5, window_bounds = array<i64: 16, 128>}]} {
    %c0_i32 = arith.constant 0 : i32
    %0 = arith.cmpi eq, %arg1, %c0_i32 : i32
    %1 = arith.extui %0 : i1 to i32
    %c0_i32_0 = arith.constant 0 : i32
    %2 = arith.cmpi ne, %1, %c0_i32_0 : i32
    scf.if %2 {
      %cst_10 = arith.constant 0.000000e+00 : f32
      %12 = vector.broadcast %cst_10 : f32 to vector<16x128xf32>
      %c0_11 = arith.constant 0 : index
      %c0_12 = arith.constant 0 : index
      %13 = vector.load %arg8[%c0_11, %c0_12] : memref<16x128xf32, #tpu.memory_space<vmem>>, vector<16x128xf32>
      tpu.vector_store %arg8[%c0_11, %c0_12], %12 {strides = array<i32>} : memref<16x128xf32, #tpu.memory_space<vmem>>, vector<16x128xf32>,
    } else {
    }
    %c0 = arith.constant 0 : index
    %c0_1 = arith.constant 0 : index
    %3 = vector.load %arg8[%c0, %c0_1] : memref<16x128xf32, #tpu.memory_space<vmem>>, vector<16x128xf32>
    %c0_2 = arith.constant 0 : index
    %c0_3 = arith.constant 0 : index
    %4 = vector.load %arg2[%c0_2, %c0_3] : memref<16x128xbf16, #tpu.memory_space<vmem>>, vector<16x128xbf16>
    %c0_4 = arith.constant 0 : index
    %c0_5 = arith.constant 0 : index
    %5 = vector.load %arg3[%c0_4, %c0_5] : memref<128x128xbf16, #tpu.memory_space<vmem>>, vector<128x128xbf16>
    %cst = arith.constant dense<0.000000e+00> : vector<16x128xf32>
    %6 = tpu.matmul %4, %5, %cst {dimension_numbers = #tpu.dot_dimension_numbers<[1], [0], [0], [1], [0, 0, 1, 1], [], []>} : vector<16x128xbf16>, vector<128x128xbf16>, vector<16x128xf32> -> vector<16x128xf32>
    %7 = arith.addf %3, %6 : vector<16x128xf32>
    %c0_6 = arith.constant 0 : index
    %c0_7 = arith.constant 0 : index
    %8 = vector.load %arg8[%c0_6, %c0_7] : memref<16x128xf32, #tpu.memory_space<vmem>>, vector<16x128xf32>
    tpu.vector_store %arg8[%c0_6, %c0_7], %7 {strides = array<i32>} : memref<16x128xf32, #tpu.memory_space<vmem>>, vector<16x128xf32>,
    %c0_i32_8 = arith.constant 0 : i32
    %9 = arith.cmpi eq, %arg1, %c0_i32_8 : i32
    %10 = arith.extui %9 : i1 to i32
    %c0_i32_9 = arith.constant 0 : i32
    %11 = arith.cmpi ne, %10, %c0_i32_9 : i32
    scf.if %11 {
      %c0_10 = arith.constant 0 : index
      %c0_11 = arith.constant 0 : index
      %12 = vector.load %arg8[%c0_10, %c0_11] : memref<16x128xf32, #tpu.memory_space<vmem>>, vector<16x128xf32>
      %c0_12 = arith.constant 0 : index
      %c0_13 = arith.constant 0 : index
      %13 = vector.load %arg4[%c0_12, %c0_13] : memref<1x128xf32, #tpu.memory_space<vmem>>, vector<1x128xf32>
      %14 = vector.broadcast %13 : vector<1x128xf32> to vector<16x128xf32>
      %15 = arith.addf %12, %14 : vector<16x128xf32>
      %cst_14 = arith.constant 0.000000e+00 : f32
      %16 = vector.broadcast %cst_14 : f32 to vector<16x128xf32>
      %17 = arith.maximumf %15, %16 : vector<16x128xf32>
      %18 = arith.truncf %17 : vector<16x128xf32> to vector<16x128xbf16>
      %c0_15 = arith.constant 0 : index
      %c0_16 = arith.constant 0 : index
      %19 = vector.load %arg5[%c0_15, %c0_16] : memref<128x128xbf16, #tpu.memory_space<vmem>>, vector<128x128xbf16>
      %cst_17 = arith.constant dense<0.000000e+00> : vector<16x128xf32>
      %20 = tpu.matmul %18, %19, %cst_17 {dimension_numbers = #tpu.dot_dimension_numbers<[1], [0], [0], [1], [0, 0, 1, 1], [], []>} : vector<16x128xbf16>, vector<128x128xbf16>, vector<16x128xf32> -> vector<16x128xf32>
      %c0_18 = arith.constant 0 : index
      %c0_19 = arith.constant 0 : index
      %21 = vector.load %arg6[%c0_18, %c0_19] : memref<1x128xf32, #tpu.memory_space<vmem>>, vector<1x128xf32>
      %22 = vector.broadcast %21 : vector<1x128xf32> to vector<16x128xf32>
      %23 = arith.addf %20, %22 : vector<16x128xf32>
      %24 = arith.truncf %23 : vector<16x128xf32> to vector<16x128xbf16>
      %c0_20 = arith.constant 0 : index
      %c0_21 = arith.constant 0 : index
      %25 = vector.load %arg7[%c0_20, %c0_21] : memref<16x128xbf16, #tpu.memory_space<vmem>>, vector<16x128xbf16>
      tpu.vector_store %arg7[%c0_20, %c0_21], %24 {strides = array<i32>} : memref<16x128xbf16, #tpu.memory_space<vmem>>, vector<16x128xbf16>,
    } else {
    }
    return
  }
  func.func @transform_0(%arg0: i32, %arg1: i32) -> (i32, i32) {
    %c0_i32 = arith.constant 0 : i32
    return %arg0, %arg1 : i32, i32
  }
  func.func @transform_1(%arg0: i32, %arg1: i32) -> (i32, i32) {
    %c0_i32 = arith.constant 0 : i32
    %c0_i32_0 = arith.constant 0 : i32
    return %arg1, %c0_i32 : i32, i32
  }
  func.func @transform_2(%arg0: i32, %arg1: i32) -> (i32, i32) {
    %c0_i32 = arith.constant 0 : i32
    %c0_i32_0 = arith.constant 0 : i32
    %c0_i32_1 = arith.constant 0 : i32
    return %c0_i32, %c0_i32_0 : i32, i32
  }
  func.func @transform_3(%arg0: i32, %arg1: i32) -> (i32, i32) {
    %c0_i32 = arith.constant 0 : i32
    %c0_i32_0 = arith.constant 0 : i32
    %c0_i32_1 = arith.constant 0 : i32
    return %c0_i32, %c0_i32_0 : i32, i32
  }
  func.func @transform_4(%arg0: i32, %arg1: i32) -> (i32, i32) {
    %c0_i32 = arith.constant 0 : i32
    %c0_i32_0 = arith.constant 0 : i32
    %c0_i32_1 = arith.constant 0 : i32
    return %c0_i32, %c0_i32_0 : i32, i32
  }
  func.func @transform_5(%arg0: i32, %arg1: i32) -> (i32, i32) {
    %c0_i32 = arith.constant 0 : i32
    %c0_i32_0 = arith.constant 0 : i32
    return %arg0, %c0_i32 : i32, i32
  }
}

</mosaic_0001>

<llo_original>
// kernel: tpu_custom_call.1
$region0: #{tpu_custom_call.1}
  #allocation0 [shape = 'u32[]', space=smem, size = 0x4, offset = 0x4, fixed_abs, tag = 'smem constant byte address 0x4 - core index']
  #allocation1 [shape = 'u32[72,128]{1,0:T(1,128)}', space=vmem, size = 0x9000, scoped, tag = 'internal scratch']
  #allocation2 [shape = 'f32[16,128]{1,0:T(8,128)}', space=vmem, size = 0x2000, scoped, tag = 'scratch operand']
  %s0 = inlined_call_operand.hbm [shape: bf16[16,128], index: 0, kind: input, shape index: {}]
  %s1 = inlined_call_operand.hbm [shape: bf16[128,128], index: 1, kind: input, shape index: {}]
  %s2 = inlined_call_operand.vmem [shape: f32[1,128], index: 2, kind: input, shape index: {}]
  %s3 = inlined_call_operand.hbm [shape: bf16[128,128], index: 3, kind: input, shape index: {}]
  %s4 = inlined_call_operand.vmem [shape: f32[1,128], index: 4, kind: input, shape index: {}]
  %s5 = inlined_call_operand.hbm [shape: bf16[16,128], index: 5, kind: output, shape index: {}]
  %s6 = sld [smem:[#allocation0]]
  $region50: #{tpu_custom_call.1} parent=0
    _
  %s8 = ssub.s32 1, %s6
  %s9 = scalar_select 0, %s8, %s6
  $region1: #{tpu_custom_call.1} parent=0
    #allocation3 [shape = 'u8[4096]{0}', space=vmem, size = 0x1000, scoped, tag = 'input window, operand 0, single buffered']
    #allocation4 [shape = 's32[1]{0}', space=sflag, size = 0x4, scoped, tag = 'scoped memory for tpu_custom_call.1']
    #allocation5 [shape = 's32[1]{0}', space=sflag, size = 0x4, scoped, tag = 'scoped memory for tpu_custom_call.1']
    #allocation6 [shape = 'u8[32768]{0}', space=vmem, size = 0x8000, scoped, tag = 'input window, operand 1, single buffered']
    #allocation7 [shape = 's32[1]{0}', space=sflag, size = 0x4, scoped, tag = 'scoped memory for tpu_custom_call.1']
    #allocation8 [shape = 'u8[32768]{0}', space=vmem, size = 0x8000, scoped, tag = 'input window, operand 3, single buffered']
    #allocation9 [shape = 'u8[4096]{0}', space=vmem, size = 0x1000, scoped, tag = 'output window, operand 0, single buffered']
    %10 = vsyncpa [#allocation4], 0
    %11 = vsyncpa [#allocation7], 0
    %12 = vsyncpa [#allocation5], 0
    // Predicated region
    $region2: #{tpu_custom_call.1} parent=1 // pred_check
      _
    $region3: #{tpu_custom_call.1} parent=1 // pred_check_branch
      %14 = sbr.rel (0) target = $region5
    $region4: #{tpu_custom_call.1} parent=1 // pred_region
      %16 = vsyncadd [#allocation4], 0
      %s17 = sshll.u32 %s0, 4
      %s18 = int_to_ptr.hbm [resolvable:$true] %s17
      %s19 = sshll.u32 [#allocation3], 4
      %s20 = int_to_ptr.vmem [resolvable:$true] %s19
      %25 = dma.hbm_to_vmem [thread:$0]  %s18, 128, %s20, [#allocation4], 64, 64, 4
    $region5: #{tpu_custom_call.1} parent=1 // pred_fallthru
      _
    // Predicated region
    $region6: #{tpu_custom_call.1} parent=1 // pred_check
      _
    $region7: #{tpu_custom_call.1} parent=1 // pred_check_branch
      %27 = sbr.rel (0) target = $region9
    $region8: #{tpu_custom_call.1} parent=1 // pred_region
      %29 = vsyncadd [#allocation7], 0
      %s30 = sshll.u32 %s1, 4
      %s31 = int_to_ptr.hbm [resolvable:$true] %s30
      %s32 = sshll.u32 [#allocation6], 4
      %s33 = int_to_ptr.vmem [resolvable:$true] %s32
      %38 = dma.hbm_to_vmem [thread:$0]  %s31, 1024, %s33, [#allocation7], 64, 64, 4
    $region9: #{tpu_custom_call.1} parent=1 // pred_fallthru
      _
    // Predicated region
    $region10: #{tpu_custom_call.1} parent=1 // pred_check
      _
    $region11: #{tpu_custom_call.1} parent=1 // pred_check_branch
      %40 = sbr.rel (0) target = $region13
    $region12: #{tpu_custom_call.1} parent=1 // pred_region
      _
    $region13: #{tpu_custom_call.1} parent=1 // pred_fallthru
      _
    // Predicated region
    $region14: #{tpu_custom_call.1} parent=1 // pred_check
      _
    $region15: #{tpu_custom_call.1} parent=1 // pred_check_branch
      %42 = sbr.rel (0) target = $region17
    $region16: #{tpu_custom_call.1} parent=1 // pred_region
      %44 = vsyncadd [#allocation7], 0
      %s45 = sshll.u32 %s3, 4
      %s46 = int_to_ptr.hbm [resolvable:$true] %s45
      %s47 = sshll.u32 [#allocation8], 4
      %s48 = int_to_ptr.vmem [resolvable:$true] %s47
      %53 = dma.hbm_to_vmem [thread:$0]  %s46, 1024, %s48, [#allocation7], 64, 64, 4
    $region17: #{tpu_custom_call.1} parent=1 // pred_fallthru
      _
    // Predicated region
    $region18: #{tpu_custom_call.1} parent=1 // pred_check
      _
    $region19: #{tpu_custom_call.1} parent=1 // pred_check_branch
      %55 = sbr.rel (0) target = $region21
    $region20: #{tpu_custom_call.1} parent=1 // pred_region
      _
    $region21: #{tpu_custom_call.1} parent=1 // pred_fallthru
      _
    // Predicated region
    $region22: #{tpu_custom_call.1} parent=1 // pred_check
      _
    $region23: #{tpu_custom_call.1} parent=1 // pred_check_branch
      %57 = sbr.rel (0) target = $region25
    $region24: #{tpu_custom_call.1} parent=1 // pred_region
      %59 = dma.done [#allocation4], 128
    $region25: #{tpu_custom_call.1} parent=1 // pred_fallthru
      _
    // Predicated region
    $region26: #{tpu_custom_call.1} parent=1 // pred_check
      _
    $region27: #{tpu_custom_call.1} parent=1 // pred_check_branch
      %61 = sbr.rel (0) target = $region29
    $region28: #{tpu_custom_call.1} parent=1 // pred_region
      %63 = dma.done [#allocation7], 1024
    $region29: #{tpu_custom_call.1} parent=1 // pred_fallthru
      _
    // Predicated region
    $region30: #{tpu_custom_call.1} parent=1 // pred_check
      _
    $region31: #{tpu_custom_call.1} parent=1 // pred_check_branch
      %65 = sbr.rel (0) target = $region33
    $region32: #{tpu_custom_call.1} parent=1 // pred_region
      %67 = dma.done [#allocation7], 1024
    $region33: #{tpu_custom_call.1} parent=1 // pred_fallthru
      _
    %p68 = scmp.eq.s32.totalorder 0, 0
    // Predicated region
    $region34: #{tpu_custom_call.1} parent=1 // pred_check
      %p69 = pneg %p68
    $region35: #{tpu_custom_call.1} parent=1 // pred_check_branch
      %71 = sbr.rel (%p69) target = $region37
    $region36: #{tpu_custom_call.1} parent=1 // pred_region
      %72 = vst [vmem:[#allocation2] sm:$0xff] 0.0
      %73 = vst [vmem:[#allocation2 + $0x8] sm:$0xff] 0.0
    $region37: #{tpu_custom_call.1} parent=1 // pred_fallthru
      _
    %v74 = vld [vmem:[#allocation2] sm:$0xff]
    %v75 = vld [vmem:[#allocation2 + $0x8] sm:$0xff]
    %v76 = vld [vmem:[#allocation3] sm:$0xf]
    %v77 = vld [vmem:[#allocation3 + $0x4] sm:$0xf]
    %v78 = vld [vmem:[#allocation6] sm:$0xf]
    %v79 = vld [vmem:[#allocation6 + $0x4] sm:$0xf]
    %v80 = vld [vmem:[#allocation6 + $0x8] sm:$0xf]
    %v81 = vld [vmem:[#allocation6 + $0xc] sm:$0xf]
    %v82 = vld [vmem:[#allocation6 + $0x10] sm:$0xf]
    %v83 = vld [vmem:[#allocation6 + $0x14] sm:$0xf]
    %v84 = vld [vmem:[#allocation6 + $0x18] sm:$0xf]
    %v85 = vld [vmem:[#allocation6 + $0x1c] sm:$0xf]
    %v86 = vld [vmem:[#allocation6 + $0x20] sm:$0xf]
    %v87 = vld [vmem:[#allocation6 + $0x24] sm:$0xf]
    %v88 = vld [vmem:[#allocation6 + $0x28] sm:$0xf]
    %v89 = vld [vmem:[#allocation6 + $0x2c] sm:$0xf]
    %v90 = vld [vmem:[#allocation6 + $0x30] sm:$0xf]
    %v91 = vld [vmem:[#allocation6 + $0x34] sm:$0xf]
    %v92 = vld [vmem:[#allocation6 + $0x38] sm:$0xf]
    %v93 = vld [vmem:[#allocation6 + $0x3c] sm:$0xf]
    %v96 = vunpack.c.l.b16 %v76
    %v97 = vunpack.c.l.b16 %v77
    %v98 = vpack.c.b16 %v97, %v96
    %v116 = vunpack.c.l.b16 %v78
    %v117 = vunpack.c.l.b16 %v79
    %v118 = vunpack.c.l.b16 %v80
    %v119 = vunpack.c.l.b16 %v81
    %v120 = vunpack.c.l.b16 %v82
    %v121 = vunpack.c.l.b16 %v83
    %v122 = vunpack.c.l.b16 %v84
    %v123 = vunpack.c.l.b16 %v85
    %v124 = vunpack.c.l.b16 %v86
    %v125 = vunpack.c.l.b16 %v87
    %v126 = vunpack.c.l.b16 %v88
    %v127 = vunpack.c.l.b16 %v89
    %v128 = vunpack.c.l.b16 %v90
    %v129 = vunpack.c.l.b16 %v91
    %v130 = vunpack.c.l.b16 %v92
    %v131 = vunpack.c.l.b16 %v93
    %v132 = vpack.c.b16 %v117, %v116
    %v133 = vpack.c.b16 %v119, %v118
    %v134 = vpack.c.b16 %v121, %v120
    %v135 = vpack.c.b16 %v123, %v122
    %v136 = vpack.c.b16 %v125, %v124
    %v137 = vpack.c.b16 %v127, %v126
    %v138 = vpack.c.b16 %v129, %v128
    %v139 = vpack.c.b16 %v131, %v130
    %148 = vmatpush.bf16.msra.mxu0 %v139
    %149 = vmatpush.bf16.msra.mxu0 %v138
    %150 = vmatpush.bf16.msra.mxu0 %v137
    %151 = vmatpush.bf16.msra.mxu0 %v136
    %152 = vmatpush.bf16.msra.mxu0 %v135
    %153 = vmatpush.bf16.msra.mxu0 %v134
    %154 = vmatpush.bf16.msra.mxu0 %v133
    %155 = vmatpush.bf16.msra.mxu0 %v132
    %156 = vmatmul.bf16.gmra.mxu0 %v98
    %v157 = vpop.f32.mrf.mxu0
    %v158 = vadd.f32 0.0, %v157
    %v159 = vpop.f32.mrf.mxu0
    %v160 = vadd.f32 0.0, %v159
    %161 = vdwg.mxu0
    %v162 = vadd.f32 %v74, %v158
    %v163 = vadd.f32 %v75, %v160
    %164 = vst [vmem:[#allocation2] sm:$0xff] %v162
    %165 = vst [vmem:[#allocation2 + $0x8] sm:$0xff] %v163
    // Predicated region
    $region38: #{tpu_custom_call.1} parent=1 // pred_check
      %p166 = pneg %p68
    $region39: #{tpu_custom_call.1} parent=1 // pred_check_branch
      %168 = sbr.rel (%p166) target = $region41
    $region40: #{tpu_custom_call.1} parent=1 // pred_region
      %v169 = vld [vmem:[#allocation2] sm:$0xff]
      %v170 = vld [vmem:[#allocation2 + $0x8] sm:$0xff]
      %v171 = vld [vmem:[%s2] sm:$0x1]
      %v173 = vperm.slane %v171, 0
      %v175 = vadd.f32 %v169, %v173
      %v176 = vadd.f32 %v170, %v173
      %v177 = vmax.f32 %v175, 0.0
      %v178 = vmax.f32 %v176, 0.0
      %v179 = vpack.c.bf16 %v178, %v177
      %v180 = vld [vmem:[#allocation8] sm:$0xf]
      %v181 = vld [vmem:[#allocation8 + $0x4] sm:$0xf]
      %v182 = vld [vmem:[#allocation8 + $0x8] sm:$0xf]
      %v183 = vld [vmem:[#allocation8 + $0xc] sm:$0xf]
      %v184 = vld [vmem:[#allocation8 + $0x10] sm:$0xf]
      %v185 = vld [vmem:[#allocation8 + $0x14] sm:$0xf]
      %v186 = vld [vmem:[#allocation8 + $0x18] sm:$0xf]
      %v187 = vld [vmem:[#allocation8 + $0x1c] sm:$0xf]
      %v188 = vld [vmem:[#allocation8 + $0x20] sm:$0xf]
      %v189 = vld [vmem:[#allocation8 + $0x24] sm:$0xf]
      %v190 = vld [vmem:[#allocation8 + $0x28] sm:$0xf]
      %v191 = vld [vmem:[#allocation8 + $0x2c] sm:$0xf]
      %v192 = vld [vmem:[#allocation8 + $0x30] sm:$0xf]
      %v193 = vld [vmem:[#allocation8 + $0x34] sm:$0xf]
      %v194 = vld [vmem:[#allocation8 + $0x38] sm:$0xf]
      %v195 = vld [vmem:[#allocation8 + $0x3c] sm:$0xf]
      %v196 = vld [vmem:[%s4] sm:$0x1]
      %v198 = vperm.slane %v196, 0
      %v216 = vunpack.c.l.b16 %v180
      %v217 = vunpack.c.l.b16 %v181
      %v218 = vunpack.c.l.b16 %v182
      %v219 = vunpack.c.l.b16 %v183
      %v220 = vunpack.c.l.b16 %v184
      %v221 = vunpack.c.l.b16 %v185
      %v222 = vunpack.c.l.b16 %v186
      %v223 = vunpack.c.l.b16 %v187
      %v224 = vunpack.c.l.b16 %v188
      %v225 = vunpack.c.l.b16 %v189
      %v226 = vunpack.c.l.b16 %v190
      %v227 = vunpack.c.l.b16 %v191
      %v228 = vunpack.c.l.b16 %v192
      %v229 = vunpack.c.l.b16 %v193
      %v230 = vunpack.c.l.b16 %v194
      %v231 = vunpack.c.l.b16 %v195
      %v232 = vpack.c.b16 %v217, %v216
      %v233 = vpack.c.b16 %v219, %v218
      %v234 = vpack.c.b16 %v221, %v220
      %v235 = vpack.c.b16 %v223, %v222
      %v236 = vpack.c.b16 %v225, %v224
      %v237 = vpack.c.b16 %v227, %v226
      %v238 = vpack.c.b16 %v229, %v228
      %v239 = vpack.c.b16 %v231, %v230
      %248 = vmatpush.bf16.msra.mxu0 %v239
      %249 = vmatpush.bf16.msra.mxu0 %v238
      %250 = vmatpush.bf16.msra.mxu0 %v237
      %251 = vmatpush.bf16.msra.mxu0 %v236
      %252 = vmatpush.bf16.msra.mxu0 %v235
      %253 = vmatpush.bf16.msra.mxu0 %v234
      %254 = vmatpush.bf16.msra.mxu0 %v233
      %255 = vmatpush.bf16.msra.mxu0 %v232
      %256 = vmatmul.bf16.gmra.mxu0 %v179
      %v257 = vpop.f32.mrf.mxu0
      %v258 = vadd.f32 %v198, %v257
      %v259 = vpop.f32.mrf.mxu0
      %v260 = vadd.f32 %v198, %v259
      %261 = vdwg.mxu0
      %v262 = vpack.c.bf16 %v258, %v258
      %v263 = vpack.c.bf16 %v260, %v260
      %264 = vst [vmem:[#allocation9] sm:$0xf] %v262
      %265 = vst [vmem:[#allocation9 + $0x4] sm:$0xf] %v263
    $region41: #{tpu_custom_call.1} parent=1 // pred_fallthru
      _
    // Predicated region
    $region42: #{tpu_custom_call.1} parent=1 // pred_check
      _
    $region43: #{tpu_custom_call.1} parent=1 // pred_check_branch
      %267 = sbr.rel (0) target = $region45
    $region44: #{tpu_custom_call.1} parent=1 // pred_region
      %269 = vsyncadd [#allocation5], 0
      %s270 = sshll.u32 [#allocation9], 4
      %s271 = int_to_ptr.vmem [resolvable:$true] %s270
      %s272 = sshll.u32 %s5, 4
      %s273 = int_to_ptr.hbm [resolvable:$true] %s272
      %278 = dma.vmem_to_hbm [thread:$0]  %s271, 128, %s273, [#allocation5], 64, 64, 4
    $region45: #{tpu_custom_call.1} parent=1 // pred_fallthru
      _
    // Predicated region
    $region46: #{tpu_custom_call.1} parent=1 // pred_check
      _
    $region47: #{tpu_custom_call.1} parent=1 // pred_check_branch
      %280 = sbr.rel (0) target = $region49
    $region48: #{tpu_custom_call.1} parent=1 // pred_region
      %282 = dma.done [#allocation5], 128
    $region49: #{tpu_custom_call.1} parent=1 // pred_fallthru
      _
    %283 = vsyncpa [#allocation4], 1
    %284 = vsyncpa [#allocation7], 1
    %285 = vsyncpa [#allocation5], 1

// kernel: tpu_custom_call.1
$region0: #{tpu_custom_call.1}
  #allocation0 [shape = 'u32[]', space=smem, size = 0x4, offset = 0x4, fixed_abs, tag = 'smem constant byte address 0x4 - core index']
  #allocation1 [shape = 'u32[72,128]{1,0:T(1,128)}', space=vmem, size = 0x9000, scoped, tag = 'internal scratch']
  #allocation2 [shape = 'f32[16,128]{1,0:T(8,128)}', space=vmem, size = 0x2000, scoped, tag = 'scratch operand']
  %s0 = inlined_call_operand.hbm [shape: bf16[16,128], index: 0, kind: input, shape index: {}]
  %s1 = inlined_call_operand.hbm [shape: bf16[128,128], index: 1, kind: input, shape index: {}]
  %s2 = inlined_call_operand.vmem [shape: f32[1,128], index: 2, kind: input, shape index: {}]
  %s3 = inlined_call_operand.hbm [shape: bf16[128,128], index: 3, kind: input, shape index: {}]
  %s4 = inlined_call_operand.vmem [shape: f32[1,128], index: 4, kind: input, shape index: {}]
  %s5 = inlined_call_operand.hbm [shape: bf16[16,128], index: 5, kind: output, shape index: {}]
  %s6 = sld [smem:[#allocation0]]
  $region50: #{tpu_custom_call.1} parent=0
    _
  %s8 = ssub.s32 1, %s6
  %s9 = scalar_select 0, %s8, %s6
  $region1: #{tpu_custom_call.1} parent=0
    #allocation3 [shape = 'u8[4096]{0}', space=vmem, size = 0x1000, scoped, tag = 'input window, operand 0, single buffered']
    #allocation4 [shape = 's32[1]{0}', space=sflag, size = 0x4, scoped, tag = 'scoped memory for tpu_custom_call.1']
    #allocation5 [shape = 's32[1]{0}', space=sflag, size = 0x4, scoped, tag = 'scoped memory for tpu_custom_call.1']
    #allocation6 [shape = 'u8[32768]{0}', space=vmem, size = 0x8000, scoped, tag = 'input window, operand 1, single buffered']
    #allocation7 [shape = 's32[1]{0}', space=sflag, size = 0x4, scoped, tag = 'scoped memory for tpu_custom_call.1']
    #allocation8 [shape = 'u8[32768]{0}', space=vmem, size = 0x8000, scoped, tag = 'input window, operand 3, single buffered']
    #allocation9 [shape = 'u8[4096]{0}', space=vmem, size = 0x1000, scoped, tag = 'output window, operand 0, single buffered']
    %10 = vsyncpa [#allocation4], 0
    %11 = vsyncpa [#allocation7], 0
    %12 = vsyncpa [#allocation5], 0
    // Predicated region
    $region2: #{tpu_custom_call.1} parent=1 // pred_check
      _
    $region3: #{tpu_custom_call.1} parent=1 // pred_check_branch
      %14 = sbr.rel (0) target = $region5
    $region4: #{tpu_custom_call.1} parent=1 // pred_region
      %16 = vsyncadd [#allocation4], 0
      %s17 = sshll.u32 %s0, 4
      %s18 = int_to_ptr.hbm [resolvable:$true] %s17
      %s19 = sshll.u32 [#allocation3], 4
      %s20 = int_to_ptr.vmem [resolvable:$true] %s19
      %25 = dma.hbm_to_vmem [thread:$0]  %s18, 128, %s20, [#allocation4], 64, 64, 4
    $region5: #{tpu_custom_call.1} parent=1 // pred_fallthru
      _
    // Predicated region
    $region6: #{tpu_custom_call.1} parent=1 // pred_check
      _
    $region7: #{tpu_custom_call.1} parent=1 // pred_check_branch
      %27 = sbr.rel (0) target = $region9
    $region8: #{tpu_custom_call.1} parent=1 // pred_region
      %29 = vsyncadd [#allocation7], 0
      %s30 = sshll.u32 %s1, 4
      %s31 = int_to_ptr.hbm [resolvable:$true] %s30
      %s32 = sshll.u32 [#allocation6], 4
      %s33 = int_to_ptr.vmem [resolvable:$true] %s32
      %38 = dma.hbm_to_vmem [thread:$0]  %s31, 1024, %s33, [#allocation7], 64, 64, 4
    $region9: #{tpu_custom_call.1} parent=1 // pred_fallthru
      _
    // Predicated region
    $region10: #{tpu_custom_call.1} parent=1 // pred_check
      _
    $region11: #{tpu_custom_call.1} parent=1 // pred_check_branch
      %40 = sbr.rel (0) target = $region13
    $region12: #{tpu_custom_call.1} parent=1 // pred_region
      _
    $region13: #{tpu_custom_call.1} parent=1 // pred_fallthru
      _
    // Predicated region
    $region14: #{tpu_custom_call.1} parent=1 // pred_check
      _
    $region15: #{tpu_custom_call.1} parent=1 // pred_check_branch
      %42 = sbr.rel (0) target = $region17
    $region16: #{tpu_custom_call.1} parent=1 // pred_region
      %44 = vsyncadd [#allocation7], 0
      %s45 = sshll.u32 %s3, 4
      %s46 = int_to_ptr.hbm [resolvable:$true] %s45
      %s47 = sshll.u32 [#allocation8], 4
      %s48 = int_to_ptr.vmem [resolvable:$true] %s47
      %53 = dma.hbm_to_vmem [thread:$0]  %s46, 1024, %s48, [#allocation7], 64, 64, 4
    $region17: #{tpu_custom_call.1} parent=1 // pred_fallthru
      _
    // Predicated region
    $region18: #{tpu_custom_call.1} parent=1 // pred_check
      _
    $region19: #{tpu_custom_call.1} parent=1 // pred_check_branch
      %55 = sbr.rel (0) target = $region21
    $region20: #{tpu_custom_call.1} parent=1 // pred_region
      _
    $region21: #{tpu_custom_call.1} parent=1 // pred_fallthru
      _
    // Predicated region
    $region22: #{tpu_custom_call.1} parent=1 // pred_check
      _
    $region23: #{tpu_custom_call.1} parent=1 // pred_check_branch
      %57 = sbr.rel (0) target = $region25
    $region24: #{tpu_custom_call.1} parent=1 // pred_region
      %59 = dma.done [#allocation4], 128
    $region25: #{tpu_custom_call.1} parent=1 // pred_fallthru
      _
    // Predicated region
    $region26: #{tpu_custom_call.1} parent=1 // pred_check
      _
    $region27: #{tpu_custom_call.1} parent=1 // pred_check_branch
      %61 = sbr.rel (0) target = $region29
    $region28: #{tpu_custom_call.1} parent=1 // pred_region
      %63 = dma.done [#allocation7], 1024
    $region29: #{tpu_custom_call.1} parent=1 // pred_fallthru
      _
    // Predicated region
    $region30: #{tpu_custom_call.1} parent=1 // pred_check
      _
    $region31: #{tpu_custom_call.1} parent=1 // pred_check_branch
      %65 = sbr.rel (0) target = $region33
    $region32: #{tpu_custom_call.1} parent=1 // pred_region
      %67 = dma.done [#allocation7], 1024
    $region33: #{tpu_custom_call.1} parent=1 // pred_fallthru
      _
    %p68 = scmp.eq.s32.totalorder 0, 0
    // Predicated region
    $region34: #{tpu_custom_call.1} parent=1 // pred_check
      %p69 = pneg %p68
    $region35: #{tpu_custom_call.1} parent=1 // pred_check_branch
      %71 = sbr.rel (%p69) target = $region37
    $region36: #{tpu_custom_call.1} parent=1 // pred_region
      %72 = vst [vmem:[#allocation2] sm:$0xff] 0.0
      %73 = vst [vmem:[#allocation2 + $0x8] sm:$0xff] 0.0
    $region37: #{tpu_custom_call.1} parent=1 // pred_fallthru
      _
    %v74 = vld [vmem:[#allocation2] sm:$0xff]
    %v75 = vld [vmem:[#allocation2 + $0x8] sm:$0xff]
    %v76 = vld [vmem:[#allocation3] sm:$0xf]
    %v77 = vld [vmem:[#allocation3 + $0x4] sm:$0xf]
    %v78 = vld [vmem:[#allocation6] sm:$0xf]
    %v79 = vld [vmem:[#allocation6 + $0x4] sm:$0xf]
    %v80 = vld [vmem:[#allocation6 + $0x8] sm:$0xf]
    %v81 = vld [vmem:[#allocation6 + $0xc] sm:$0xf]
    %v82 = vld [vmem:[#allocation6 + $0x10] sm:$0xf]
    %v83 = vld [vmem:[#allocation6 + $0x14] sm:$0xf]
    %v84 = vld [vmem:[#allocation6 + $0x18] sm:$0xf]
    %v85 = vld [vmem:[#allocation6 + $0x1c] sm:$0xf]
    %v86 = vld [vmem:[#allocation6 + $0x20] sm:$0xf]
    %v87 = vld [vmem:[#allocation6 + $0x24] sm:$0xf]
    %v88 = vld [vmem:[#allocation6 + $0x28] sm:$0xf]
    %v89 = vld [vmem:[#allocation6 + $0x2c] sm:$0xf]
    %v90 = vld [vmem:[#allocation6 + $0x30] sm:$0xf]
    %v91 = vld [vmem:[#allocation6 + $0x34] sm:$0xf]
    %v92 = vld [vmem:[#allocation6 + $0x38] sm:$0xf]
    %v93 = vld [vmem:[#allocation6 + $0x3c] sm:$0xf]
    %v96 = vunpack.c.l.b16 %v76
    %v97 = vunpack.c.l.b16 %v77
    %v98 = vpack.c.b16 %v97, %v96
    %v116 = vunpack.c.l.b16 %v78
    %v117 = vunpack.c.l.b16 %v79
    %v118 = vunpack.c.l.b16 %v80
    %v119 = vunpack.c.l.b16 %v81
    %v120 = vunpack.c.l.b16 %v82
    %v121 = vunpack.c.l.b16 %v83
    %v122 = vunpack.c.l.b16 %v84
    %v123 = vunpack.c.l.b16 %v85
    %v124 = vunpack.c.l.b16 %v86
    %v125 = vunpack.c.l.b16 %v87
    %v126 = vunpack.c.l.b16 %v88
    %v127 = vunpack.c.l.b16 %v89
    %v128 = vunpack.c.l.b16 %v90
    %v129 = vunpack.c.l.b16 %v91
    %v130 = vunpack.c.l.b16 %v92
    %v131 = vunpack.c.l.b16 %v93
    %v132 = vpack.c.b16 %v117, %v116
    %v133 = vpack.c.b16 %v119, %v118
    %v134 = vpack.c.b16 %v121, %v120
    %v135 = vpack.c.b16 %v123, %v122
    %v136 = vpack.c.b16 %v125, %v124
    %v137 = vpack.c.b16 %v127, %v126
    %v138 = vpack.c.b16 %v129, %v128
    %v139 = vpack.c.b16 %v131, %v130
    %148 = vmatpush.bf16.msra.mxu0 %v139
    %149 = vmatpush.bf16.msra.mxu0 %v138
    %150 = vmatpush.bf16.msra.mxu0 %v137
    %151 = vmatpush.bf16.msra.mxu0 %v136
    %152 = vmatpush.bf16.msra.mxu0 %v135
    %153 = vmatpush.bf16.msra.mxu0 %v134
    %154 = vmatpush.bf16.msra.mxu0 %v133
    %155 = vmatpush.bf16.msra.mxu0 %v132
    %156 = vmatmul.bf16.gmra.mxu0 %v98
    %v157 = vpop.f32.mrf.mxu0
    %v158 = vadd.f32 0.0, %v157
    %v159 = vpop.f32.mrf.mxu0
    %v160 = vadd.f32 0.0, %v159
    %161 = vdwg.mxu0
    %v162 = vadd.f32 %v74, %v158
    %v163 = vadd.f32 %v75, %v160
    %164 = vst [vmem:[#allocation2] sm:$0xff] %v162
    %165 = vst [vmem:[#allocation2 + $0x8] sm:$0xff] %v163
    // Predicated region
    $region38: #{tpu_custom_call.1} parent=1 // pred_check
      %p166 = pneg %p68
    $region39: #{tpu_custom_call.1} parent=1 // pred_check_branch
      %168 = sbr.rel (%p166) target = $region41
    $region40: #{tpu_custom_call.1} parent=1 // pred_region
      %v169 = vld [vmem:[#allocation2] sm:$0xff]
      %v170 = vld [vmem:[#allocation2 + $0x8] sm:$0xff]
      %v171 = vld [vmem:[%s2] sm:$0x1]
      %v173 = vperm.slane %v171, 0
      %v175 = vadd.f32 %v169, %v173
      %v176 = vadd.f32 %v170, %v173
      %v177 = vmax.f32 %v175, 0.0
      %v178 = vmax.f32 %v176, 0.0
      %v179 = vpack.c.bf16 %v178, %v177
      %v180 = vld [vmem:[#allocation8] sm:$0xf]
      %v181 = vld [vmem:[#allocation8 + $0x4] sm:$0xf]
      %v182 = vld [vmem:[#allocation8 + $0x8] sm:$0xf]
      %v183 = vld [vmem:[#allocation8 + $0xc] sm:$0xf]
      %v184 = vld [vmem:[#allocation8 + $0x10] sm:$0xf]
      %v185 = vld [vmem:[#allocation8 + $0x14] sm:$0xf]
      %v186 = vld [vmem:[#allocation8 + $0x18] sm:$0xf]
      %v187 = vld [vmem:[#allocation8 + $0x1c] sm:$0xf]
      %v188 = vld [vmem:[#allocation8 + $0x20] sm:$0xf]
      %v189 = vld [vmem:[#allocation8 + $0x24] sm:$0xf]
      %v190 = vld [vmem:[#allocation8 + $0x28] sm:$0xf]
      %v191 = vld [vmem:[#allocation8 + $0x2c] sm:$0xf]
      %v192 = vld [vmem:[#allocation8 + $0x30] sm:$0xf]
      %v193 = vld [vmem:[#allocation8 + $0x34] sm:$0xf]
      %v194 = vld [vmem:[#allocation8 + $0x38] sm:$0xf]
      %v195 = vld [vmem:[#allocation8 + $0x3c] sm:$0xf]
      %v196 = vld [vmem:[%s4] sm:$0x1]
      %v198 = vperm.slane %v196, 0
      %v216 = vunpack.c.l.b16 %v180
      %v217 = vunpack.c.l.b16 %v181
      %v218 = vunpack.c.l.b16 %v182
      %v219 = vunpack.c.l.b16 %v183
      %v220 = vunpack.c.l.b16 %v184
      %v221 = vunpack.c.l.b16 %v185
      %v222 = vunpack.c.l.b16 %v186
      %v223 = vunpack.c.l.b16 %v187
      %v224 = vunpack.c.l.b16 %v188
      %v225 = vunpack.c.l.b16 %v189
      %v226 = vunpack.c.l.b16 %v190
      %v227 = vunpack.c.l.b16 %v191
      %v228 = vunpack.c.l.b16 %v192
      %v229 = vunpack.c.l.b16 %v193
      %v230 = vunpack.c.l.b16 %v194
      %v231 = vunpack.c.l.b16 %v195
      %v232 = vpack.c.b16 %v217, %v216
      %v233 = vpack.c.b16 %v219, %v218
      %v234 = vpack.c.b16 %v221, %v220
      %v235 = vpack.c.b16 %v223, %v222
      %v236 = vpack.c.b16 %v225, %v224
      %v237 = vpack.c.b16 %v227, %v226
      %v238 = vpack.c.b16 %v229, %v228
      %v239 = vpack.c.b16 %v231, %v230
      %248 = vmatpush.bf16.msra.mxu0 %v239
      %249 = vmatpush.bf16.msra.mxu0 %v238
      %250 = vmatpush.bf16.msra.mxu0 %v237
      %251 = vmatpush.bf16.msra.mxu0 %v236
      %252 = vmatpush.bf16.msra.mxu0 %v235
      %253 = vmatpush.bf16.msra.mxu0 %v234
      %254 = vmatpush.bf16.msra.mxu0 %v233
      %255 = vmatpush.bf16.msra.mxu0 %v232
      %256 = vmatmul.bf16.gmra.mxu0 %v179
      %v257 = vpop.f32.mrf.mxu0
      %v258 = vadd.f32 %v198, %v257
      %v259 = vpop.f32.mrf.mxu0
      %v260 = vadd.f32 %v198, %v259
      %261 = vdwg.mxu0
      %v262 = vpack.c.bf16 %v258, %v258
      %v263 = vpack.c.bf16 %v260, %v260
      %264 = vst [vmem:[#allocation9] sm:$0xf] %v262
      %265 = vst [vmem:[#allocation9 + $0x4] sm:$0xf] %v263
    $region41: #{tpu_custom_call.1} parent=1 // pred_fallthru
      _
    // Predicated region
    $region42: #{tpu_custom_call.1} parent=1 // pred_check
      _
    $region43: #{tpu_custom_call.1} parent=1 // pred_check_branch
      %267 = sbr.rel (0) target = $region45
    $region44: #{tpu_custom_call.1} parent=1 // pred_region
      %269 = vsyncadd [#allocation5], 0
      %s270 = sshll.u32 [#allocation9], 4
      %s271 = int_to_ptr.vmem [resolvable:$true] %s270
      %s272 = sshll.u32 %s5, 4
      %s273 = int_to_ptr.hbm [resolvable:$true] %s272
      %278 = dma.vmem_to_hbm [thread:$0]  %s271, 128, %s273, [#allocation5], 64, 64, 4
    $region45: #{tpu_custom_call.1} parent=1 // pred_fallthru
      _
    // Predicated region
    $region46: #{tpu_custom_call.1} parent=1 // pred_check
      _
    $region47: #{tpu_custom_call.1} parent=1 // pred_check_branch
      %280 = sbr.rel (0) target = $region49
    $region48: #{tpu_custom_call.1} parent=1 // pred_region
      %282 = dma.done [#allocation5], 128
    $region49: #{tpu_custom_call.1} parent=1 // pred_fallthru
      _
    %283 = vsyncpa [#allocation4], 1
    %284 = vsyncpa [#allocation7], 1
    %285 = vsyncpa [#allocation5], 1

</llo_original>
